<compile_context>
chip_gen: v7x
topology: tpu7x:2x2x1
jax: 0.10.0
libtpu: 0.0.40
codegen_flags: <defaults>
</compile_context>

<pallas_src>
import functools

import jax
import jax.numpy as jnp
from jax.experimental import pallas as pl
from jax.experimental.pallas import tpu as pltpu

LANES = 128                 # lane width (last dim of every block)
DEFAULT_TILE_ROWS = 2048    # 2048 x 128 x 4B = 1 MiB per input block


def _dice_kernel(x_ref, t_ref, oi_ref, ost_ref, *, tm, n_valid, need_mask):
    """Accumulate sum(sigmoid(x)*t) and sum(sigmoid(x)+t) into (8,128) outputs."""
    i = pl.program_id(0)

    @pl.when(i == 0)
    def _():
        oi_ref[...] = jnp.zeros_like(oi_ref)
        ost_ref[...] = jnp.zeros_like(ost_ref)

    x = x_ref[...].astype(jnp.float32)
    t = t_ref[...].astype(jnp.float32)
    # sigmoid(x) = 0.5 * (1 + tanh(x/2)): a single EUP push per vreg
    # (instead of exp + reciprocal).
    s = 0.5 * (jnp.tanh(0.5 * x) + 1.0)

    if need_mask:
        # Mask padded lanes / out-of-bounds rows of the (partial) last block.
        # `where` selects 0 for invalid positions, so garbage (even NaN/Inf)
        # read past the array bounds never reaches the sums.
        row = jax.lax.broadcasted_iota(jnp.int32, (tm, LANES), 0) + i * tm
        lane = jax.lax.broadcasted_iota(jnp.int32, (tm, LANES), 1)
        valid = row * LANES + lane < n_valid
        s = jnp.where(valid, s, 0.0)
        t = jnp.where(valid, t, 0.0)

    # Lane-parallel partial sums: pure cross-vreg VALU adds down to one (8,128)
    # slab, accumulated element-wise into the resident output buffers.  The
    # only cross-lane reduce happens once, in the wrapper, after the grid.
    inter = (s * t).reshape(tm // 8, 8, LANES).sum(axis=0)
    st = (s + t).reshape(tm // 8, 8, LANES).sum(axis=0)
    oi_ref[...] += inter
    ost_ref[...] += st


def dice_loss(inp, target, *, tile_rows=DEFAULT_TILE_ROWS):
    if inp.shape != target.shape:
        raise ValueError(
            "Target size ({}) must be the same as input size ({})".format(
                target.shape, inp.shape))

    x = jnp.reshape(inp, (-1,))
    t = jnp.reshape(target, (-1,))
    n = x.shape[0]
    if n == 0:
        return jnp.float32(0.0)  # 1 - (0 + 1) / (0 + 0 + 1)

    rows = (n + LANES - 1) // LANES
    if rows <= tile_rows:
        # Whole problem is a single block: round rows up to a sublane multiple
        # so the in-kernel (tm//8, 8, 128) reshape is always valid.
        rows_p = ((rows + 7) // 8) * 8
        tm = rows_p
    else:
        rows_p = rows           # no row padding; cdiv grid + in-kernel masking
        tm = tile_rows
    grid = pl.cdiv(rows_p, tm)
    need_mask = (rows_p * LANES != n) or (rows_p % tm != 0)

    pad = rows_p * LANES - n
    if pad:
        # Only hit when the flat size is not a 128 multiple (or is tiny):
        # at most one lane-row group of zeros; masked out inside the kernel.
        x = jnp.pad(x, (0, pad))
        t = jnp.pad(t, (0, pad))
    x2 = x.reshape(rows_p, LANES)
    t2 = t.reshape(rows_p, LANES)

    kernel = functools.partial(
        _dice_kernel, tm=tm, n_valid=n, need_mask=need_mask)

    # Note: outputs act as accumulators across the serial grid, so the axis is
    # "arbitrary".  For v7x dual-TensorCore, this structure extends naturally
    # to a leading size-2 "parallel" axis with per-core partial outputs.
    out_inter, out_st = pl.pallas_call(
        kernel,
        out_shape=(
            jax.ShapeDtypeStruct((8, LANES), jnp.float32),
            jax.ShapeDtypeStruct((8, LANES), jnp.float32),
        ),
        grid_spec=pltpu.PrefetchScalarGridSpec(
            num_scalar_prefetch=0,
            grid=(grid,),
            in_specs=[
                pl.BlockSpec((tm, LANES), lambda i: (i, 0)),
                pl.BlockSpec((tm, LANES), lambda i: (i, 0)),
            ],
            out_specs=(
                pl.BlockSpec((8, LANES), lambda i: (0, 0)),
                pl.BlockSpec((8, LANES), lambda i: (0, 0)),
            ),
        ),
        compiler_params=pltpu.CompilerParams(
            dimension_semantics=("arbitrary",)),
    )(x2, t2)

    smooth = 1.0
    intersection = jnp.sum(out_inter)
    denom = jnp.sum(out_st) + smooth
    return 1.0 - (2.0 * intersection + smooth) / denom


def _dice_ref(inp, target):
    s = jax.nn.sigmoid(inp.astype(jnp.float32)).reshape(-1)
    t = target.astype(jnp.float32).reshape(-1)
    smooth = 1.0
    inter = jnp.sum(s * t)
    return 1.0 - (2.0 * inter + smooth) / (jnp.sum(s) + jnp.sum(t) + smooth)


if __name__ == "__main__":
    key = jax.random.PRNGKey(0)
    k1, k2, k3, k4, k5, k6 = jax.random.split(key, 6)

    # Case 1: NCHW logits + binary target, 128-aligned flat size (no masking).
    x1 = jax.random.normal(k1, (2, 4, 16, 16), dtype=jnp.float32)
    y1 = (jax.random.uniform(k2, (2, 4, 16, 16)) > 0.5).astype(jnp.float32)
    l1 = dice_loss(x1, y1)
    jax.block_until_ready(l1)
    r1 = _dice_ref(x1, y1)
    assert jnp.allclose(l1, r1, atol=1e-5, rtol=1e-5), (l1, r1)

    # Case 2: unaligned flat size + bf16 binary target (lane pad + in-kernel
    # mask + narrow target dtype streamed directly).
    x2 = jax.random.normal(k3, (2, 3, 13, 17), dtype=jnp.float32)
    y2 = (jax.random.uniform(k4, (2, 3, 13, 17)) > 0.5).astype(jnp.bfloat16)
    l2 = dice_loss(x2, y2)
    jax.block_until_ready(l2)
    r2 = _dice_ref(x2, y2)
    assert jnp.allclose(l2, r2, atol=1e-5, rtol=1e-5), (l2, r2)

    # Case 3: multi-step grid with a partial (masked) last block — small
    # tile_rows so the accumulator path across grid steps is exercised.
    x3 = jax.random.normal(k5, (2, 4, 40, 32), dtype=jnp.float32)
    y3 = (jax.random.uniform(k6, (2, 4, 40, 32)) > 0.5).astype(jnp.float32)
    l3 = dice_loss(x3, y3, tile_rows=64)
    jax.block_until_ready(l3)
    r3 = _dice_ref(x3, y3)
    assert jnp.allclose(l3, r3, atol=1e-5, rtol=1e-5), (l3, r3)

    print("KERNEL_OK")
</pallas_src>

<mosaic_0001>
module attributes {stable_mosaic.version = 11 : i64} {
  func.func @_dice_kernel(%arg0: i32, %arg1: memref<16x128xf32, #tpu.memory_space<vmem>>, %arg2: memref<16x128xf32, #tpu.memory_space<vmem>>, %arg3: memref<8x128xf32, #tpu.memory_space<vmem>>, %arg4: memref<8x128xf32, #tpu.memory_space<vmem>>) attributes {dimension_semantics = [#tpu.dimension_semantics<arbitrary>], iteration_bounds = array<i64: 1>, scalar_prefetch = 0 : i64, scratch_operands = 0 : i64, tpu.core_type = #tpu.core_type<tc>, window_params = [{transform_indices = @transform_0, window_bounds = array<i64: 16, 128>}, {transform_indices = @transform_1, window_bounds = array<i64: 16, 128>}, {pipeline_mode = #tpu.pipeline_mode<synchronous>, transform_indices = @transform_2, window_bounds = array<i64: 8, 128>}, {pipeline_mode = #tpu.pipeline_mode<synchronous>, transform_indices = @transform_3, window_bounds = array<i64: 8, 128>}]} {
    %c0_i32 = arith.constant 0 : i32
    %0 = arith.cmpi eq, %arg0, %c0_i32 : i32
    %1 = arith.extui %0 : i1 to i32
    %c0_i32_0 = arith.constant 0 : i32
    %2 = arith.cmpi ne, %1, %c0_i32_0 : i32
    scf.if %2 {
      %cst_16 = arith.constant 0.000000e+00 : f32
      %24 = vector.broadcast %cst_16 : f32 to vector<8x128xf32>
      %c0_17 = arith.constant 0 : index
      %c0_18 = arith.constant 0 : index
      %25 = vector.load %arg3[%c0_17, %c0_18] : memref<8x128xf32, #tpu.memory_space<vmem>>, vector<8x128xf32>
      tpu.vector_store %arg3[%c0_17, %c0_18], %24 {strides = array<i32>} : memref<8x128xf32, #tpu.memory_space<vmem>>, vector<8x128xf32>,
      %cst_19 = arith.constant 0.000000e+00 : f32
      %26 = vector.broadcast %cst_19 : f32 to vector<8x128xf32>
      %c0_20 = arith.constant 0 : index
      %c0_21 = arith.constant 0 : index
      %27 = vector.load %arg4[%c0_20, %c0_21] : memref<8x128xf32, #tpu.memory_space<vmem>>, vector<8x128xf32>
      tpu.vector_store %arg4[%c0_20, %c0_21], %26 {strides = array<i32>} : memref<8x128xf32, #tpu.memory_space<vmem>>, vector<8x128xf32>,
    } else {
    }
    %c0 = arith.constant 0 : index
    %c0_1 = arith.constant 0 : index
    %3 = vector.load %arg1[%c0, %c0_1] : memref<16x128xf32, #tpu.memory_space<vmem>>, vector<16x128xf32>
    %c0_2 = arith.constant 0 : index
    %c0_3 = arith.constant 0 : index
    %4 = vector.load %arg2[%c0_2, %c0_3] : memref<16x128xf32, #tpu.memory_space<vmem>>, vector<16x128xf32>
    %cst = arith.constant 5.000000e-01 : f32
    %5 = vector.broadcast %cst : f32 to vector<16x128xf32>
    %6 = arith.mulf %5, %3 : vector<16x128xf32>
    %7 = math.tanh %6 : vector<16x128xf32>
    %cst_4 = arith.constant 1.000000e+00 : f32
    %8 = vector.broadcast %cst_4 : f32 to vector<16x128xf32>
    %9 = arith.addf %7, %8 : vector<16x128xf32>
    %cst_5 = arith.constant 5.000000e-01 : f32
    %10 = vector.broadcast %cst_5 : f32 to vector<16x128xf32>
    %11 = arith.mulf %10, %9 : vector<16x128xf32>
    %12 = arith.mulf %11, %4 : vector<16x128xf32>
    %13 = vector.shape_cast %12 : vector<16x128xf32> to vector<2x8x128xf32>
    %cst_6 = arith.constant dense<0.000000e+00> : vector<8x128xf32>
    %14 = vector.multi_reduction <add>, %13, %cst_6 [0] : vector<2x8x128xf32> to vector<8x128xf32>
    %15 = arith.addf %11, %4 : vector<16x128xf32>
    %16 = vector.shape_cast %15 : vector<16x128xf32> to vector<2x8x128xf32>
    %cst_7 = arith.constant dense<0.000000e+00> : vector<8x128xf32>
    %17 = vector.multi_reduction <add>, %16, %cst_7 [0] : vector<2x8x128xf32> to vector<8x128xf32>
    %c0_8 = arith.constant 0 : index
    %c0_9 = arith.constant 0 : index
    %18 = vector.load %arg3[%c0_8, %c0_9] : memref<8x128xf32, #tpu.memory_space<vmem>>, vector<8x128xf32>
    %19 = arith.addf %18, %14 : vector<8x128xf32>
    %c0_10 = arith.constant 0 : index
    %c0_11 = arith.constant 0 : index
    %20 = vector.load %arg3[%c0_10, %c0_11] : memref<8x128xf32, #tpu.memory_space<vmem>>, vector<8x128xf32>
    tpu.vector_store %arg3[%c0_10, %c0_11], %19 {strides = array<i32>} : memref<8x128xf32, #tpu.memory_space<vmem>>, vector<8x128xf32>,
    %c0_12 = arith.constant 0 : index
    %c0_13 = arith.constant 0 : index
    %21 = vector.load %arg4[%c0_12, %c0_13] : memref<8x128xf32, #tpu.memory_space<vmem>>, vector<8x128xf32>
    %22 = arith.addf %21, %17 : vector<8x128xf32>
    %c0_14 = arith.constant 0 : index
    %c0_15 = arith.constant 0 : index
    %23 = vector.load %arg4[%c0_14, %c0_15] : memref<8x128xf32, #tpu.memory_space<vmem>>, vector<8x128xf32>
    tpu.vector_store %arg4[%c0_14, %c0_15], %22 {strides = array<i32>} : memref<8x128xf32, #tpu.memory_space<vmem>>, vector<8x128xf32>,
    return
  }
  func.func @transform_0(%arg0: i32) -> (i32, i32) {
    %c0_i32 = arith.constant 0 : i32
    %c0_i32_0 = arith.constant 0 : i32
    return %arg0, %c0_i32 : i32, i32
  }
  func.func @transform_1(%arg0: i32) -> (i32, i32) {
    %c0_i32 = arith.constant 0 : i32
    %c0_i32_0 = arith.constant 0 : i32
    return %arg0, %c0_i32 : i32, i32
  }
  func.func @transform_2(%arg0: i32) -> (i32, i32) {
    %c0_i32 = arith.constant 0 : i32
    %c0_i32_0 = arith.constant 0 : i32
    %c0_i32_1 = arith.constant 0 : i32
    return %c0_i32, %c0_i32_0 : i32, i32
  }
  func.func @transform_3(%arg0: i32) -> (i32, i32) {
    %c0_i32 = arith.constant 0 : i32
    %c0_i32_0 = arith.constant 0 : i32
    %c0_i32_1 = arith.constant 0 : i32
    return %c0_i32, %c0_i32_0 : i32, i32
  }
}

</mosaic_0001>

<llo_original>
// kernel: tpu_custom_call.1
$region0: #{tpu_custom_call.1}
  #allocation0 [shape = 'u32[]', space=smem, size = 0x4, offset = 0x4, fixed_abs, tag = 'smem constant byte address 0x4 - core index']
  #allocation1 [shape = 'u32[144,128]{1,0:T(1,128)}', space=vmem, size = 0x12000, scoped, tag = 'internal scratch']
  %s0 = inlined_call_operand.hbm [shape: f32[16,128], index: 0, kind: input, shape index: {}]
  %s1 = inlined_call_operand.hbm [shape: f32[16,128], index: 1, kind: input, shape index: {}]
  %s2 = inlined_call_operand.hbm [shape: f32[8,128], index: 2, kind: output, shape index: {0}]
  %s3 = inlined_call_operand.hbm [shape: f32[8,128], index: 3, kind: output, shape index: {1}]
  %4 = xla_tuple %s2, %s3
  %s5 = sld [smem:[#allocation0]]
  $region38: #{tpu_custom_call.1} parent=0
    _
  %s7 = ssub.s32 1, %s5
  %s8 = scalar_select 0, %s7, %s5
  $region1: #{tpu_custom_call.1} parent=0
    #allocation2 [shape = 'u8[8192]{0}', space=vmem, size = 0x2000, scoped, tag = 'input window, operand 0, single buffered']
    #allocation3 [shape = 's32[1]{0}', space=sflag, size = 0x4, scoped, tag = 'scoped memory for tpu_custom_call.1']
    #allocation4 [shape = 's32[1]{0}', space=sflag, size = 0x4, scoped, tag = 'scoped memory for tpu_custom_call.1']
    #allocation5 [shape = 'u8[8192]{0}', space=vmem, size = 0x2000, scoped, tag = 'input window, operand 1, single buffered']
    #allocation6 [shape = 's32[1]{0}', space=sflag, size = 0x4, scoped, tag = 'scoped memory for tpu_custom_call.1']
    #allocation7 [shape = 'u8[4096]{0}', space=vmem, size = 0x1000, scoped, tag = 'output window, operand 0, single buffered']
    #allocation8 [shape = 'u8[4096]{0}', space=vmem, size = 0x1000, scoped, tag = 'output window, operand 1, single buffered']
    #allocation9 [shape = 's32[1]{0}', space=sflag, size = 0x4, scoped, tag = 'scoped memory for tpu_custom_call.1']
    %9 = vsyncpa [#allocation3], 0
    %10 = vsyncpa [#allocation6], 0
    %11 = vsyncpa [#allocation4], 0
    %12 = vsyncpa [#allocation9], 0
    // Predicated region
    $region2: #{tpu_custom_call.1} parent=1 // pred_check
      _
    $region3: #{tpu_custom_call.1} parent=1 // pred_check_branch
      %14 = sbr.rel (0) target = $region5
    $region4: #{tpu_custom_call.1} parent=1 // pred_region
      %s16 = ssub.s32 256, 256
      %17 = vsyncadd [#allocation3], %s16
      %s18 = sshll.u32 [#allocation2], 4
      %s19 = int_to_ptr.vmem [resolvable:$true] %s18
      %24 = dma.hbm_to_vmem [thread:$0]  %s0, 256, %s19, [#allocation3], 128, 128, 8
    $region5: #{tpu_custom_call.1} parent=1 // pred_fallthru
      _
    // Predicated region
    $region6: #{tpu_custom_call.1} parent=1 // pred_check
      _
    $region7: #{tpu_custom_call.1} parent=1 // pred_check_branch
      %26 = sbr.rel (0) target = $region9
    $region8: #{tpu_custom_call.1} parent=1 // pred_region
      %s28 = ssub.s32 256, 256
      %29 = vsyncadd [#allocation6], %s28
      %s30 = sshll.u32 [#allocation5], 4
      %s31 = int_to_ptr.vmem [resolvable:$true] %s30
      %36 = dma.hbm_to_vmem [thread:$0]  %s1, 256, %s31, [#allocation6], 128, 128, 8
    $region9: #{tpu_custom_call.1} parent=1 // pred_fallthru
      _
    // Predicated region
    $region10: #{tpu_custom_call.1} parent=1 // pred_check
      _
    $region11: #{tpu_custom_call.1} parent=1 // pred_check_branch
      %38 = sbr.rel (0) target = $region13
    $region12: #{tpu_custom_call.1} parent=1 // pred_region
      %39 = dma.done [#allocation3], 256
    $region13: #{tpu_custom_call.1} parent=1 // pred_fallthru
      _
    // Predicated region
    $region14: #{tpu_custom_call.1} parent=1 // pred_check
      _
    $region15: #{tpu_custom_call.1} parent=1 // pred_check_branch
      %41 = sbr.rel (0) target = $region17
    $region16: #{tpu_custom_call.1} parent=1 // pred_region
      %42 = dma.done [#allocation6], 256
    $region17: #{tpu_custom_call.1} parent=1 // pred_fallthru
      _
    %p43 = scmp.eq.s32.totalorder 0, 0
    // Predicated region
    $region18: #{tpu_custom_call.1} parent=1 // pred_check
      %p44 = pneg %p43
    $region19: #{tpu_custom_call.1} parent=1 // pred_check_branch
      %46 = sbr.rel (%p44) target = $region21
    $region20: #{tpu_custom_call.1} parent=1 // pred_region
      %47 = vst [vmem:[#allocation7] sm:$0xff] 0.0
      %48 = vst [vmem:[#allocation8] sm:$0xff] 0.0
    $region21: #{tpu_custom_call.1} parent=1 // pred_fallthru
      _
    %v49 = vld [vmem:[#allocation2] sm:$0xff]
    %v50 = vld [vmem:[#allocation2 + $0x8] sm:$0xff]
    %v51 = vld [vmem:[#allocation5] sm:$0xff]
    %v52 = vld [vmem:[#allocation5 + $0x8] sm:$0xff]
    %v53 = vmul.f32 %v49, 0.5
    %v54 = vmul.f32 %v50, 0.5
    %v55 = vtanh.pop %v53
    %v56 = vtanh.pop %v54
    %v57 = vadd.f32 %v55, 1.0
    %v58 = vadd.f32 %v56, 1.0
    %v59 = vmul.f32 %v57, 0.5
    %v60 = vmul.f32 %v58, 0.5
    %v61 = vmul.f32 %v59, %v51
    %v62 = vmul.f32 %v60, %v52
    %v63 = vadd.f32 %v61, %v62
    %v64 = vadd.f32 %v59, %v51
    %v65 = vadd.f32 %v60, %v52
    %v66 = vadd.f32 %v64, %v65
    %v67 = vld [vmem:[#allocation7] sm:$0xff]
    %v68 = vadd.f32 %v67, %v63
    %69 = vst [vmem:[#allocation7] sm:$0xff] %v68
    %v70 = vld [vmem:[#allocation8] sm:$0xff]
    %v71 = vadd.f32 %v70, %v66
    %72 = vst [vmem:[#allocation8] sm:$0xff] %v71
    // Predicated region
    $region22: #{tpu_custom_call.1} parent=1 // pred_check
      _
    $region23: #{tpu_custom_call.1} parent=1 // pred_check_branch
      %74 = sbr.rel (0) target = $region25
    $region24: #{tpu_custom_call.1} parent=1 // pred_region
      %s76 = ssub.s32 128, 128
      %77 = vsyncadd [#allocation4], %s76
      %s79 = sshll.u32 [#allocation7], 4
      %s80 = int_to_ptr.vmem [resolvable:$true] %s79
      %82 = dma.vmem_to_hbm [thread:$0]  %s80, 128, %s2, [#allocation4]
    $region25: #{tpu_custom_call.1} parent=1 // pred_fallthru
      _
    // Predicated region
    $region26: #{tpu_custom_call.1} parent=1 // pred_check
      _
    $region27: #{tpu_custom_call.1} parent=1 // pred_check_branch
      %84 = sbr.rel (0) target = $region29
    $region28: #{tpu_custom_call.1} parent=1 // pred_region
      %s86 = ssub.s32 128, 128
      %87 = vsyncadd [#allocation9], %s86
      %s89 = sshll.u32 [#allocation8], 4
      %s90 = int_to_ptr.vmem [resolvable:$true] %s89
      %92 = dma.vmem_to_hbm [thread:$0]  %s90, 128, %s3, [#allocation9]
    $region29: #{tpu_custom_call.1} parent=1 // pred_fallthru
      _
    // Predicated region
    $region30: #{tpu_custom_call.1} parent=1 // pred_check
      _
    $region31: #{tpu_custom_call.1} parent=1 // pred_check_branch
      %94 = sbr.rel (0) target = $region33
    $region32: #{tpu_custom_call.1} parent=1 // pred_region
      %95 = dma.done [#allocation4], 128
    $region33: #{tpu_custom_call.1} parent=1 // pred_fallthru
      _
    // Predicated region
    $region34: #{tpu_custom_call.1} parent=1 // pred_check
      _
    $region35: #{tpu_custom_call.1} parent=1 // pred_check_branch
      %97 = sbr.rel (0) target = $region37
    $region36: #{tpu_custom_call.1} parent=1 // pred_region
      %98 = dma.done [#allocation9], 128
    $region37: #{tpu_custom_call.1} parent=1 // pred_fallthru
      _
    %99 = vsyncpa [#allocation3], 1
    %100 = vsyncpa [#allocation6], 1
    %101 = vsyncpa [#allocation4], 1
    %102 = vsyncpa [#allocation9], 1

</llo_original>
